<compile_context>
chip_gen: v7x
topology: tpu7x:2x2x1
jax: 0.10.0
libtpu: 0.0.40
codegen_flags: <defaults>
</compile_context>

<pallas_src>
import functools

import numpy as np
import jax
import jax.numpy as jnp
from jax import lax
from jax.experimental import pallas as pl
from jax.experimental.pallas import tpu as pltpu


_NCOLS = 5      # [mos_mean_t, mos_mean_p, targets[:,0], preds[:,0], row_sum_sq_err]
_TB_MAX = 2048  # batch rows per grid step (each f32 row costs 512 B of tiled VMEM)


# ----------------------------- Pallas kernel -------------------------------

def _fused_kernel(t_ref, p_ref, out_ref, *, batch, tile_rows, mask_rows):
    """Inputs are (tile_rows, D) blocks of targets / preds (native dtype).

    Output block (tile_rows, _NCOLS) f32, columns:
      0: weighted MOS mean of targets   (sum(t * arange(D)) / 5, as in the ref)
      1: weighted MOS mean of preds
      2: targets[:, 0]
      3: preds[:, 0]
      4: per-row sum of squared error (wrapper sums these and scales by 1/(B*D))
    Rows beyond `batch` (ragged last tile) are zeroed so they contribute
    nothing to the loss and are sliced off by the wrapper.
    """
    t = t_ref[...].astype(jnp.float32)          # (tb, D)
    p = p_ref[...].astype(jnp.float32)
    tb, d = t.shape

    if mask_rows:  # static: only emitted when the last tile is ragged
        i = pl.program_id(0)
        row = lax.broadcasted_iota(jnp.int32, (tb, 1), 0) + i * tile_rows
        valid = row < batch
        t = jnp.where(valid, t, 0.0)
        p = jnp.where(valid, p, 0.0)

    # Weighted MOS mean per row.  NOTE: the reference hardcodes "/ 5"
    # (compute_mean_std_mos with rng=(0,5)); we match that exactly.
    pos = lax.broadcasted_iota(jnp.int32, (1, d), 1).astype(jnp.float32)
    mean_t = jnp.sum(t * pos, axis=1, keepdims=True) * 0.2       # (tb, 1)
    mean_p = jnp.sum(p * pos, axis=1, keepdims=True) * 0.2       # (tb, 1)

    col_t0 = t[:, 0:1]                                           # (tb, 1)
    col_p0 = p[:, 0:1]                                           # (tb, 1)

    diff = p - t
    sq_row = jnp.sum(diff * diff, axis=1, keepdims=True)         # (tb, 1)

    # Assemble the (tb, _NCOLS) block with lane selects and do ONE full-block
    # store (no per-column partial stores).
    lane = lax.broadcasted_iota(jnp.int32, (tb, _NCOLS), 1)
    out = jnp.where(lane == 0, mean_t,
          jnp.where(lane == 1, mean_p,
          jnp.where(lane == 2, col_t0,
          jnp.where(lane == 3, col_p0, sq_row))))
    out_ref[...] = out


def _fused_stats(preds, targets, max_tile_rows):
    """Single pallas_call producing the (B_padded, _NCOLS) stats array."""
    B, D = preds.shape
    if B <= max_tile_rows:
        tb, nsteps = B, 1                 # single step, block == full array
    else:
        tb = max_tile_rows
        assert tb % 8 == 0, "max_tile_rows must be a multiple of 8"
        nsteps = int(pl.cdiv(B, tb))
    bp = tb * nsteps

    kernel = functools.partial(_fused_kernel, batch=B, tile_rows=tb,
                               mask_rows=(bp != B))

    return pl.pallas_call(
        kernel,
        out_shape=jax.ShapeDtypeStruct((bp, _NCOLS), jnp.float32),
        grid=(nsteps,),
        in_specs=[pl.BlockSpec((tb, D), lambda i: (i, 0)),
                  pl.BlockSpec((tb, D), lambda i: (i, 0))],
        out_specs=pl.BlockSpec((tb, _NCOLS), lambda i: (i, 0)),
        compiler_params=pltpu.CompilerParams(
            dimension_semantics=("parallel",),     # no cross-step state
            vmem_limit_bytes=32 * 1024 * 1024),    # headroom on v5e's 16 MiB default
    )(targets, preds)


# ----------------------------- device-side forward -------------------------

@functools.partial(jax.jit, static_argnames=("a2_d", "max_tile_rows"))
def _aiag_device_compute(preds, targets, a2_d, max_tile_rows):
    B, D = preds.shape
    stats = _fused_stats(preds, targets, max_tile_rows)
    # MSE: rows >= B were zeroed in-kernel, so summing the whole column is safe.
    loss = jnp.sum(stats[:, 4]) * (1.0 / float(B * D))
    if a2_d == 2:
        vals_t = stats[:B, 2]
        vals_p = stats[:B, 3]
    elif a2_d == 5:
        vals_t = stats[:B, 0]
        vals_p = stats[:B, 1]
    else:
        # Reference keeps the raw (B, D) tensors in this case.
        vals_t = targets.astype(jnp.float32)
        vals_p = preds.astype(jnp.float32)
    return loss, vals_t, vals_p


# ----------------------------- Python glue ---------------------------------

def compute_average_scores(scores, chunk=8):
    """Mean of chunks of 8 (test-phase, non-RGB ids). Host-side, tiny."""
    a = np.asarray(scores, dtype=np.float32)
    return [float(a[s:s + chunk].mean())
            for s in range(0, a.shape[0], chunk) if a[s:s + chunk].size]


class Args:
    def __init__(self, A2_D=5, id="AADB_RGB_run0"):
        self.A2_D = A2_D
        self.id = id


def aiag_loss_1_forward(outputs, targets, phase, epoch, args,
                        max_tile_rows=_TB_MAX):
    """Faithful port of AIAG_Loss_1.forward (compute fused in one Pallas kernel)."""
    preds = jnp.asarray(outputs["A2"])
    targets = jnp.asarray(targets)

    loss, vals_t, vals_p = _aiag_device_compute(
        preds, targets, int(args.A2_D), int(max_tile_rows))

    iter_results = {}
    iter_results["loss"] = loss  # device scalar (like the torch tensor in the ref)

    # Single blocking device->host transfer for everything Python needs.
    loss_h, vals_t_h, vals_p_h = jax.device_get((loss, vals_t, vals_p))
    loss_f = float(loss_h)
    iter_results["loss_A2"] = loss_f
    iter_results["loss_A2_emd"] = 0.0
    iter_results["loss_A2_bce"] = 0.0
    iter_results["loss_A2_mse"] = loss_f

    vt = np.asarray(vals_t_h).tolist()
    vp = np.asarray(vals_p_h).tolist()
    # Reference writes the same values into both the *_mean and *_std fields.
    iter_results["y_true_A2_mean"] = vt
    iter_results["y_true_A2_std"] = list(vt)
    iter_results["y_preds_A2_mean"] = vp
    iter_results["y_preds_A2_std"] = list(vp)

    if phase == "test" and "RGB" not in args.id:
        for k in ("y_true_A2_mean", "y_true_A2_std",
                  "y_preds_A2_mean", "y_preds_A2_std"):
            iter_results[k] = compute_average_scores(iter_results[k])

    return iter_results


# ----------------------------- main ----------------------------------------

if __name__ == "__main__":
    key = jax.random.PRNGKey(0)
    k1, k2, k3, k4, k5, k6 = jax.random.split(key, 6)
    D = 5
    pos_row = jnp.arange(0, 5, dtype=jnp.float32)[None, :]

    # Case 1: small train batch, RGB id (A2_D = 5 score bins per sample).
    B = 8
    preds = jax.random.normal(k1, (B, D), dtype=jnp.float32)
    targets = jax.random.uniform(k2, (B, D), dtype=jnp.float32)
    args = Args(A2_D=5, id="AADB_RGB_run0")
    res = aiag_loss_1_forward({"A2": preds}, targets, phase="train", epoch=0, args=args)
    jax.block_until_ready(res["loss"])

    ref_loss = jnp.mean((preds - targets) ** 2)
    ref_mean_t = jnp.sum(targets * pos_row, axis=1) / 5.0
    ref_mean_p = jnp.sum(preds * pos_row, axis=1) / 5.0
    assert jnp.allclose(res["loss"], ref_loss, atol=1e-5)
    assert jnp.allclose(jnp.asarray(res["y_true_A2_mean"]), ref_mean_t, atol=1e-5)
    assert jnp.allclose(jnp.asarray(res["y_preds_A2_mean"]), ref_mean_p, atol=1e-5)
    assert jnp.allclose(jnp.asarray(res["y_true_A2_std"]), ref_mean_t, atol=1e-5)

    # Case 2: odd batch, test phase, non-RGB id -- exercises the MULTI-TILE
    # path (max_tile_rows=16 -> 3 grid steps, ragged last tile masked in-kernel)
    # and the chunked host-side averaging.
    B2 = 37
    preds2 = jax.random.normal(k3, (B2, D), dtype=jnp.float32)
    targets2 = jax.random.uniform(k4, (B2, D), dtype=jnp.float32)
    args2 = Args(A2_D=5, id="AADB_depth_run0")
    res2 = aiag_loss_1_forward({"A2": preds2}, targets2, phase="test", epoch=0,
                               args=args2, max_tile_rows=16)
    jax.block_until_ready(res2["loss"])

    ref_loss2 = jnp.mean((preds2 - targets2) ** 2)
    ref_mean_t2 = np.asarray(jnp.sum(targets2 * pos_row, axis=1) / 5.0)
    ref_mean_p2 = np.asarray(jnp.sum(preds2 * pos_row, axis=1) / 5.0)
    ref_chunked_t = [float(ref_mean_t2[s:s + 8].mean()) for s in range(0, B2, 8)]
    ref_chunked_p = [float(ref_mean_p2[s:s + 8].mean()) for s in range(0, B2, 8)]
    assert jnp.allclose(res2["loss"], ref_loss2, atol=1e-5)
    assert np.allclose(np.asarray(res2["y_true_A2_mean"]), np.asarray(ref_chunked_t), atol=1e-5)
    assert np.allclose(np.asarray(res2["y_preds_A2_mean"]), np.asarray(ref_chunked_p), atol=1e-5)

    # Case 3: A2_D == 2 path (column-0 extraction fused into the kernel output).
    B3 = 9
    preds3 = jax.random.normal(k5, (B3, D), dtype=jnp.float32)
    targets3 = jax.random.uniform(k6, (B3, D), dtype=jnp.float32)
    args3 = Args(A2_D=2, id="AADB_RGB_run0")
    res3 = aiag_loss_1_forward({"A2": preds3}, targets3, phase="train", epoch=0, args=args3)
    jax.block_until_ready(res3["loss"])

    assert jnp.allclose(res3["loss"], jnp.mean((preds3 - targets3) ** 2), atol=1e-5)
    assert np.allclose(np.asarray(res3["y_true_A2_mean"]), np.asarray(targets3[:, 0]), atol=1e-6)
    assert np.allclose(np.asarray(res3["y_preds_A2_mean"]), np.asarray(preds3[:, 0]), atol=1e-6)

    print("KERNEL_OK")
</pallas_src>

<mosaic_0001>
module attributes {stable_mosaic.version = 11 : i64} {
  func.func @_fused_kernel(%arg0: i32, %arg1: memref<8x5xf32, #tpu.memory_space<vmem>>, %arg2: memref<8x5xf32, #tpu.memory_space<vmem>>, %arg3: memref<8x5xf32, #tpu.memory_space<vmem>>) attributes {dimension_semantics = [#tpu.dimension_semantics<parallel>], iteration_bounds = array<i64: 1>, scalar_prefetch = 0 : i64, scratch_operands = 0 : i64, tpu.core_type = #tpu.core_type<tc>, window_params = [{transform_indices = @transform_0, window_bounds = array<i64: 8, 5>}, {transform_indices = @transform_1, window_bounds = array<i64: 8, 5>}, {transform_indices = @transform_2, window_bounds = array<i64: 8, 5>}]} {
    %c0 = arith.constant 0 : index
    %c0_0 = arith.constant 0 : index
    %0 = vector.load %arg1[%c0, %c0_0] : memref<8x5xf32, #tpu.memory_space<vmem>>, vector<8x5xf32>
    %c0_1 = arith.constant 0 : index
    %c0_2 = arith.constant 0 : index
    %1 = vector.load %arg2[%c0_1, %c0_2] : memref<8x5xf32, #tpu.memory_space<vmem>>, vector<8x5xf32>
    %2 = tpu.iota {dimensions = array<i32: 1>} : vector<1x5xi32>
    %3 = arith.sitofp %2 : vector<1x5xi32> to vector<1x5xf32>
    %4 = vector.broadcast %3 : vector<1x5xf32> to vector<8x5xf32>
    %5 = arith.mulf %0, %4 : vector<8x5xf32>
    %cst = arith.constant dense<0.000000e+00> : vector<8xf32>
    %6 = vector.multi_reduction <add>, %5, %cst [1] : vector<8x5xf32> to vector<8xf32>
    %7 = vector.shape_cast %6 : vector<8xf32> to vector<8x1xf32>
    %cst_3 = arith.constant 2.000000e-01 : f32
    %8 = vector.broadcast %cst_3 : f32 to vector<8x1xf32>
    %9 = arith.mulf %7, %8 : vector<8x1xf32>
    %10 = vector.broadcast %3 : vector<1x5xf32> to vector<8x5xf32>
    %11 = arith.mulf %1, %10 : vector<8x5xf32>
    %cst_4 = arith.constant dense<0.000000e+00> : vector<8xf32>
    %12 = vector.multi_reduction <add>, %11, %cst_4 [1] : vector<8x5xf32> to vector<8xf32>
    %13 = vector.shape_cast %12 : vector<8xf32> to vector<8x1xf32>
    %cst_5 = arith.constant 2.000000e-01 : f32
    %14 = vector.broadcast %cst_5 : f32 to vector<8x1xf32>
    %15 = arith.mulf %13, %14 : vector<8x1xf32>
    %16 = vector.extract_strided_slice %0 {offsets = [0, 0], sizes = [8, 1], strides = [1, 1]} : vector<8x5xf32> to vector<8x1xf32>
    %17 = vector.extract_strided_slice %1 {offsets = [0, 0], sizes = [8, 1], strides = [1, 1]} : vector<8x5xf32> to vector<8x1xf32>
    %18 = arith.subf %1, %0 : vector<8x5xf32>
    %19 = arith.mulf %18, %18 : vector<8x5xf32>
    %cst_6 = arith.constant dense<0.000000e+00> : vector<8xf32>
    %20 = vector.multi_reduction <add>, %19, %cst_6 [1] : vector<8x5xf32> to vector<8xf32>
    %21 = vector.shape_cast %20 : vector<8xf32> to vector<8x1xf32>
    %22 = tpu.iota {dimensions = array<i32: 1>} : vector<8x5xi32>
    %c0_i32 = arith.constant 0 : i32
    %23 = vector.broadcast %c0_i32 : i32 to vector<8x5xi32>
    %24 = arith.cmpi eq, %22, %23 : vector<8x5xi32>
    %c1_i32 = arith.constant 1 : i32
    %25 = vector.broadcast %c1_i32 : i32 to vector<8x5xi32>
    %26 = arith.cmpi eq, %22, %25 : vector<8x5xi32>
    %c2_i32 = arith.constant 2 : i32
    %27 = vector.broadcast %c2_i32 : i32 to vector<8x5xi32>
    %28 = arith.cmpi eq, %22, %27 : vector<8x5xi32>
    %c3_i32 = arith.constant 3 : i32
    %29 = vector.broadcast %c3_i32 : i32 to vector<8x5xi32>
    %30 = arith.cmpi eq, %22, %29 : vector<8x5xi32>
    %31 = vector.shape_cast %17 : vector<8x1xf32> to vector<8x1xf32>
    %32 = vector.broadcast %31 : vector<8x1xf32> to vector<8x5xf32>
    %33 = vector.shape_cast %21 : vector<8x1xf32> to vector<8x1xf32>
    %34 = vector.broadcast %33 : vector<8x1xf32> to vector<8x5xf32>
    %35 = arith.select %30, %32, %34 : vector<8x5xi1>, vector<8x5xf32>
    %36 = vector.shape_cast %16 : vector<8x1xf32> to vector<8x1xf32>
    %37 = vector.broadcast %36 : vector<8x1xf32> to vector<8x5xf32>
    %38 = arith.select %28, %37, %35 : vector<8x5xi1>, vector<8x5xf32>
    %39 = vector.shape_cast %15 : vector<8x1xf32> to vector<8x1xf32>
    %40 = vector.broadcast %39 : vector<8x1xf32> to vector<8x5xf32>
    %41 = arith.select %26, %40, %38 : vector<8x5xi1>, vector<8x5xf32>
    %42 = vector.shape_cast %9 : vector<8x1xf32> to vector<8x1xf32>
    %43 = vector.broadcast %42 : vector<8x1xf32> to vector<8x5xf32>
    %44 = arith.select %24, %43, %41 : vector<8x5xi1>, vector<8x5xf32>
    %c0_7 = arith.constant 0 : index
    %c0_8 = arith.constant 0 : index
    %45 = vector.load %arg3[%c0_7, %c0_8] : memref<8x5xf32, #tpu.memory_space<vmem>>, vector<8x5xf32>
    tpu.vector_store %arg3[%c0_7, %c0_8], %44 {strides = array<i32>} : memref<8x5xf32, #tpu.memory_space<vmem>>, vector<8x5xf32>,
    return
  }
  func.func @transform_0(%arg0: i32) -> (i32, i32) {
    %c0_i32 = arith.constant 0 : i32
    %c0_i32_0 = arith.constant 0 : i32
    return %arg0, %c0_i32 : i32, i32
  }
  func.func @transform_1(%arg0: i32) -> (i32, i32) {
    %c0_i32 = arith.constant 0 : i32
    %c0_i32_0 = arith.constant 0 : i32
    return %arg0, %c0_i32 : i32, i32
  }
  func.func @transform_2(%arg0: i32) -> (i32, i32) {
    %c0_i32 = arith.constant 0 : i32
    %c0_i32_0 = arith.constant 0 : i32
    return %arg0, %c0_i32 : i32, i32
  }
}

</mosaic_0001>

<llo_original>
// kernel: _aiag_device_compute.1
$region0: #{_aiag_device_compute.1}
  #allocation0 [shape = 'u32[]', space=smem, size = 0x4, offset = 0x4, fixed_abs, tag = 'smem constant byte address 0x4 - core index']
  #allocation1 [shape = 'u32[144,128]{1,0:T(1,128)}', space=vmem, size = 0x12000, scoped, tag = 'internal scratch']
  %s0 = inlined_call_operand.hbm [shape: f32[8,5], index: 0, kind: input, shape index: {}]
  %s1 = inlined_call_operand.hbm [shape: f32[8,5], index: 1, kind: input, shape index: {}]
  %s2 = inlined_call_operand.vmem [shape: f32[8,5], index: 2, kind: output, shape index: {}]
  %s3 = sld [smem:[#allocation0]]
  $region26: #{_aiag_device_compute.1} parent=0
    _
  %s5 = ssub.s32 1, %s3
  %s6 = scalar_select 0, %s5, %s3
  $region1: #{_aiag_device_compute.1} parent=0
    #allocation2 [shape = 'u8[4096]{0}', space=vmem, size = 0x1000, scoped, tag = 'input window, operand 0, single buffered']
    #allocation3 [shape = 's32[1]{0}', space=sflag, size = 0x4, scoped, tag = 'scoped memory for _aiag_device_compute.1']
    #allocation4 [shape = 'u8[4096]{0}', space=vmem, size = 0x1000, scoped, tag = 'input window, operand 1, single buffered']
    #allocation5 [shape = 's32[1]{0}', space=sflag, size = 0x4, scoped, tag = 'scoped memory for _aiag_device_compute.1']
    %7 = vsyncpa [#allocation3], 0
    %8 = vsyncpa [#allocation5], 0
    // Predicated region
    $region2: #{_aiag_device_compute.1} parent=1 // pred_check
      _
    $region3: #{_aiag_device_compute.1} parent=1 // pred_check_branch
      %10 = sbr.rel (0) target = $region5
    $region4: #{_aiag_device_compute.1} parent=1 // pred_region
      %s12 = ssub.s32 128, 128
      %13 = vsyncadd [#allocation3], %s12
      %s15 = sshll.u32 [#allocation2], 4
      %s16 = int_to_ptr.vmem [resolvable:$true] %s15
      %18 = dma.hbm_to_vmem [thread:$0]  %s0, 128, %s16, [#allocation3]
    $region5: #{_aiag_device_compute.1} parent=1 // pred_fallthru
      _
    // Predicated region
    $region6: #{_aiag_device_compute.1} parent=1 // pred_check
      _
    $region7: #{_aiag_device_compute.1} parent=1 // pred_check_branch
      %20 = sbr.rel (0) target = $region9
    $region8: #{_aiag_device_compute.1} parent=1 // pred_region
      %s22 = ssub.s32 128, 128
      %23 = vsyncadd [#allocation5], %s22
      %s25 = sshll.u32 [#allocation4], 4
      %s26 = int_to_ptr.vmem [resolvable:$true] %s25
      %28 = dma.hbm_to_vmem [thread:$0]  %s1, 128, %s26, [#allocation5]
    $region9: #{_aiag_device_compute.1} parent=1 // pred_fallthru
      _
    // Predicated region
    $region10: #{_aiag_device_compute.1} parent=1 // pred_check
      _
    $region11: #{_aiag_device_compute.1} parent=1 // pred_check_branch
      %30 = sbr.rel (0) target = $region13
    $region12: #{_aiag_device_compute.1} parent=1 // pred_region
      %31 = dma.done [#allocation3], 128
    $region13: #{_aiag_device_compute.1} parent=1 // pred_fallthru
      _
    // Predicated region
    $region14: #{_aiag_device_compute.1} parent=1 // pred_check
      _
    $region15: #{_aiag_device_compute.1} parent=1 // pred_check_branch
      %33 = sbr.rel (0) target = $region17
    $region16: #{_aiag_device_compute.1} parent=1 // pred_region
      %34 = dma.done [#allocation5], 128
    $region17: #{_aiag_device_compute.1} parent=1 // pred_fallthru
      _
    %v35 = vld [vmem:[#allocation2] sm:$0xff]
    %v36 = vld [vmem:[#allocation4] sm:$0xff]
    %v37 = vlaneseq
    %v38 = vand.u32 %v37, 127
    %v39 = vcvt.s32.f32 %v38
    %v40 = vmul.f32 %v35, %v39
    %vm41 = vcmask 39936
    %v42 = vsel %vm41, %v40, 0.0
    %43 = vadd.xlane.f32.xlu0 %v42
    %v44 = vpop.xlane.xlu0 %43
    %v45 = vmul.f32 %v44, 0.2
    %v46 = vmul.f32 %v36, %v39
    %v47 = vsel %vm41, %v46, 0.0
    %48 = vadd.xlane.f32.xlu0 %v47
    %v49 = vpop.xlane.xlu0 %48
    %v50 = vmul.f32 %v49, 0.2
    %v51 = vsub.f32 %v36, %v35
    %v52 = vmul.f32 %v51, %v51
    %v53 = vsel %vm41, %v52, 0.0
    %54 = vadd.xlane.f32.xlu0 %v53
    %v55 = vpop.xlane.xlu0 %54
    %vm56 = vcmp.eq.s32.totalorder %v38, 0
    %vm57 = vcmp.eq.s32.totalorder %v38, 1
    %vm58 = vcmp.eq.s32.totalorder %v38, 2
    %vm59 = vcmp.eq.s32.totalorder %v38, 3
    %61 = vset.pattern.permute.xlu0 0
    %62 = vperm.xlu0 %61, %v36
    %v63 = vpop.permute.xlu0 %62
    %v65 = vsel %vm59, %v63, %v55
    %67 = vset.pattern.permute.xlu0 0
    %68 = vperm.xlu0 %67, %v35
    %v69 = vpop.permute.xlu0 %68
    %v71 = vsel %vm58, %v69, %v65
    %v72 = vsel %vm57, %v50, %v71
    %v73 = vsel %vm56, %v45, %v72
    %74 = vst.msk [vmem:[%s2] sm:$0xff] %vm41, %v73
    // Predicated region
    $region18: #{_aiag_device_compute.1} parent=1 // pred_check
      _
    $region19: #{_aiag_device_compute.1} parent=1 // pred_check_branch
      %76 = sbr.rel (0) target = $region21
    $region20: #{_aiag_device_compute.1} parent=1 // pred_region
      _
    $region21: #{_aiag_device_compute.1} parent=1 // pred_fallthru
      _
    // Predicated region
    $region22: #{_aiag_device_compute.1} parent=1 // pred_check
      _
    $region23: #{_aiag_device_compute.1} parent=1 // pred_check_branch
      %78 = sbr.rel (0) target = $region25
    $region24: #{_aiag_device_compute.1} parent=1 // pred_region
      _
    $region25: #{_aiag_device_compute.1} parent=1 // pred_fallthru
      _
    %79 = vsyncpa [#allocation3], 1
    %80 = vsyncpa [#allocation5], 1

</llo_original>
